<compile_context>
chip_gen: v6e
topology: v6e:2x2x1
jax: 0.10.0
libtpu: 0.0.40
codegen_flags: <defaults>
</compile_context>

<pallas_src>
import jax
import jax.numpy as jnp
from jax.experimental import pallas as pl
from jax.experimental.pallas import tpu as pltpu


def make_positional_encoding(d_model: int, max_len: int = 5000, dtype=jnp.float32):
    """Sin/cos positional-encoding table, shape (max_len, 1, d_model) (PyTorch buffer)."""
    position = jnp.arange(max_len, dtype=jnp.float32)[:, None]                 # (max_len, 1)
    div_term = jnp.exp(
        jnp.arange(0, d_model, 2, dtype=jnp.float32) * (-jnp.log(10000.0) / d_model)
    )                                                                          # (ceil(d/2),)
    angles = position * div_term                                               # (max_len, ceil(d/2))
    pe = jnp.zeros((max_len, d_model), dtype=jnp.float32)
    pe = pe.at[:, 0::2].set(jnp.sin(angles))
    pe = pe.at[:, 1::2].set(jnp.cos(angles[:, : d_model // 2]))                # handles odd d_model
    return pe[:, None, :].astype(dtype)


def _add_pe_kernel(x_ref, pe_ref, o_ref):
    # Works for both layouts:
    #   3-D path: x (ts, B, td) + pe (ts, 1, td)  -> native sublane broadcast over B
    #   2-D path: x (ts, tf)   + pe (ts, tf)
    x = x_ref[...]
    o_ref[...] = (x + pe_ref[...].astype(x.dtype)).astype(o_ref.dtype)


def _vmem_limit_bytes() -> int:
    """Explicit scoped-VMEM limit: 3/4 of physical (48 MiB v7x, 96 MiB v5e/v6e)."""
    try:
        cap = int(pltpu.get_tpu_info().vmem_capacity_bytes)
    except Exception:
        cap = 64 << 20          # conservative fallback (v7x per-TensorCore physical)
    return int(min(cap * 3 // 4, 96 << 20))


def _target_slab_bytes(vmem_limit: int) -> int:
    # Double-buffered working set ~= 2 * (x slab + out slab + pe slab) ~= 4.3 * slab.
    # vmem_limit // 12 -> ~4 MiB slabs on v7x, ~8 MiB on v5e/v6e.
    return int(min(8 << 20, max(1 << 20, vmem_limit // 12)))


def _round_down8(n: int) -> int:
    return max(8, (n // 8) * 8)


def _choose_tiles_3d(S: int, B: int, D: int, itemsize: int, target_bytes: int):
    """Pick (ts, td) for the lane-dense (ts, B, td) path.  Requires D % 128 == 0."""
    b_pad = ((B + 7) // 8) * 8                       # VMEM sublane padding when B < 8
    td_cands = [c for c in range(128, D + 1, 128) if D % c == 0]
    fitting = [c for c in td_cands if 8 * b_pad * c * itemsize <= target_bytes]
    td = max(fitting) if fitting else min(td_cands)
    rows = _round_down8(target_bytes // max(1, b_pad * td * itemsize))
    ts = min(rows, S)
    # Keep >= ~8 grid steps when S allows so both v7x TensorCores get several steps
    # and the pipeline has something to overlap.
    if (D // td) * pl.cdiv(S, ts) < 8 and S >= 64:
        ts = min(ts, _round_down8(pl.cdiv(S, 8)))
    return ts, td


def _choose_tiles_2d(S: int, F: int, itemsize: int, target_bytes: int):
    """Pick (ts, tf) for the flattened (S, B*D) path."""
    if F % 128 == 0:
        tf_cands = [c for c in range(128, F + 1, 128) if F % c == 0]
        fitting = [c for c in tf_cands if 8 * c * itemsize <= target_bytes]
        tf = max(fitting) if fitting else min(tf_cands)
    else:
        # Full-dim lane block (allowed by Pallas).  NOTE: pathological configs where
        # F % 128 != 0 AND 8*F*itemsize >> target will use larger-than-target slabs.
        tf = F
    rows = _round_down8(target_bytes // max(1, tf * itemsize))
    ts = min(rows, S)
    if (F // tf) * pl.cdiv(S, ts) < 8 and S >= 64:
        ts = min(ts, _round_down8(pl.cdiv(S, 8)))
    return ts, tf


def positional_encoding_forward(x: jax.Array, pe: jax.Array,
                                seq_tile: int | None = None) -> jax.Array:
    """x: (S, B, D); pe: (max_len, 1, D) with max_len >= S.  Returns x + pe[:S]."""
    S, B, D = x.shape
    assert pe.ndim == 3 and pe.shape[1] == 1 and pe.shape[2] == D and pe.shape[0] >= S
    itemsize = x.dtype.itemsize
    vmem_limit = _vmem_limit_bytes()
    target = _target_slab_bytes(vmem_limit)
    cparams = pltpu.CompilerParams(
        dimension_semantics=("parallel", "parallel"),
        vmem_limit_bytes=vmem_limit,
    )

    if D % 128 == 0:
        # ---- lane-dense 3-D path: (ts, B, td) slabs, pe broadcast over sublanes ----
        ts, td = _choose_tiles_3d(S, B, D, itemsize, target)
        if seq_tile is not None:
            ts = min(max(8, (seq_tile // 8) * 8), S)
        grid = (pl.cdiv(S, ts), D // td)
        cost = pl.CostEstimate(
            flops=S * B * D,
            transcendentals=0,
            bytes_accessed=2 * S * B * D * itemsize + S * D * pe.dtype.itemsize,
        )
        return pl.pallas_call(
            _add_pe_kernel,
            out_shape=jax.ShapeDtypeStruct((S, B, D), x.dtype),
            grid_spec=pltpu.PrefetchScalarGridSpec(
                num_scalar_prefetch=0,
                grid=grid,
                in_specs=[
                    pl.BlockSpec((ts, B, td), lambda i, j: (i, 0, j)),   # x slab
                    pl.BlockSpec((ts, 1, td), lambda i, j: (i, 0, j)),   # pe rows (size-1 sublane)
                ],
                out_specs=pl.BlockSpec((ts, B, td), lambda i, j: (i, 0, j)),
            ),
            compiler_params=cparams,
            cost_estimate=cost,
        )(x, pe)

    # ---- degenerate lane layout (D not a multiple of 128): flatten to (S, B*D) ----
    F = B * D
    ts, tf = _choose_tiles_2d(S, F, itemsize, target)
    if seq_tile is not None:
        ts = min(max(8, (seq_tile // 8) * 8), S)
    x_flat = x.reshape(S, F)                                       # free row-major view
    # One fused broadcast+cast of the rows actually used (keeps the kernel lane-dense).
    pe_flat = jnp.broadcast_to(pe[:S], (S, B, D)).astype(x.dtype).reshape(S, F)
    grid = (pl.cdiv(S, ts), pl.cdiv(F, tf))
    cost = pl.CostEstimate(flops=S * F, transcendentals=0,
                           bytes_accessed=3 * S * F * itemsize)
    out = pl.pallas_call(
        _add_pe_kernel,
        out_shape=jax.ShapeDtypeStruct((S, F), x.dtype),
        grid_spec=pltpu.PrefetchScalarGridSpec(
            num_scalar_prefetch=0,
            grid=grid,
            in_specs=[
                pl.BlockSpec((ts, tf), lambda i, j: (i, j)),
                pl.BlockSpec((ts, tf), lambda i, j: (i, j)),
            ],
            out_specs=pl.BlockSpec((ts, tf), lambda i, j: (i, j)),
        ),
        compiler_params=cparams,
        cost_estimate=cost,
    )(x_flat, pe_flat)
    return out.reshape(S, B, D)


if __name__ == "__main__":
    key = jax.random.PRNGKey(0)

    # --- check 1: module-like small shape (d_model=32 -> lane-dense flattened path) ---
    d_model, max_len, seq_len, batch = 32, 64, 8, 2
    pe = make_positional_encoding(d_model, max_len)
    x = jax.random.normal(key, (seq_len, batch, d_model), dtype=jnp.float32)
    ref = x + pe[:seq_len]
    out = jax.block_until_ready(positional_encoding_forward(x, pe))
    assert out.shape == (seq_len, batch, d_model)
    assert jnp.allclose(out, ref, atol=1e-6), "mismatch vs reference (check 1)"

    # --- check 2: lane-dense 3-D path with a multi-step pipelined grid ---
    d2, seq2, batch2 = 128, 64, 8
    pe2 = make_positional_encoding(d2, 128)
    x2 = jax.random.normal(jax.random.PRNGKey(1), (seq2, batch2, d2), dtype=jnp.float32)
    ref2 = x2 + pe2[:seq2]
    out2 = jax.block_until_ready(positional_encoding_forward(x2, pe2, seq_tile=16))
    assert jnp.allclose(out2, ref2, atol=1e-6), "mismatch vs reference (check 2)"

    # --- check 3: bf16 input (add performed/stored in bf16; documented deviation from
    #     PyTorch's bf16 + f32-buffer -> f32 promotion) ---
    x3 = x2.astype(jnp.bfloat16)
    ref3 = x3 + pe2[:seq2].astype(jnp.bfloat16)
    out3 = jax.block_until_ready(positional_encoding_forward(x3, pe2))
    assert out3.dtype == jnp.bfloat16
    assert jnp.allclose(out3.astype(jnp.float32), ref3.astype(jnp.float32),
                        atol=1e-2), "mismatch vs reference (check 3)"

    print("KERNEL_OK")
</pallas_src>

<mosaic_0001>
module attributes {stable_mosaic.version = 11 : i64} {
  func.func @_add_pe_kernel(%arg0: i32, %arg1: i32, %arg2: memref<8x64xf32, #tpu.memory_space<vmem>>, %arg3: memref<8x64xf32, #tpu.memory_space<vmem>>, %arg4: memref<8x64xf32, #tpu.memory_space<vmem>>) attributes {dimension_semantics = [#tpu.dimension_semantics<parallel>, #tpu.dimension_semantics<parallel>], iteration_bounds = array<i64: 1, 1>, scalar_prefetch = 0 : i64, scratch_operands = 0 : i64, tpu.core_type = #tpu.core_type<tc>, window_params = [{transform_indices = @transform_0, window_bounds = array<i64: 8, 64>}, {transform_indices = @transform_1, window_bounds = array<i64: 8, 64>}, {transform_indices = @transform_2, window_bounds = array<i64: 8, 64>}]} {
    %c0 = arith.constant 0 : index
    %c0_0 = arith.constant 0 : index
    %0 = vector.load %arg2[%c0, %c0_0] : memref<8x64xf32, #tpu.memory_space<vmem>>, vector<8x64xf32>
    %c0_1 = arith.constant 0 : index
    %c0_2 = arith.constant 0 : index
    %1 = vector.load %arg3[%c0_1, %c0_2] : memref<8x64xf32, #tpu.memory_space<vmem>>, vector<8x64xf32>
    %2 = arith.addf %0, %1 : vector<8x64xf32>
    %c0_3 = arith.constant 0 : index
    %c0_4 = arith.constant 0 : index
    %3 = vector.load %arg4[%c0_3, %c0_4] : memref<8x64xf32, #tpu.memory_space<vmem>>, vector<8x64xf32>
    tpu.vector_store %arg4[%c0_3, %c0_4], %2 {strides = array<i32>} : memref<8x64xf32, #tpu.memory_space<vmem>>, vector<8x64xf32>,
    return
  }
  func.func @transform_0(%arg0: i32, %arg1: i32) -> (i32, i32) {
    %c0_i32 = arith.constant 0 : i32
    return %arg0, %arg1 : i32, i32
  }
  func.func @transform_1(%arg0: i32, %arg1: i32) -> (i32, i32) {
    %c0_i32 = arith.constant 0 : i32
    return %arg0, %arg1 : i32, i32
  }
  func.func @transform_2(%arg0: i32, %arg1: i32) -> (i32, i32) {
    %c0_i32 = arith.constant 0 : i32
    return %arg0, %arg1 : i32, i32
  }
}

</mosaic_0001>

<llo_original>
// kernel: tpu_custom_call.1
$region0: #{tpu_custom_call.1}
  #allocation0 [shape = 'u32[]', space=smem, size = 0x4, offset = 0x4, fixed_abs, tag = 'smem constant byte address 0x4 - core index']
  #allocation1 [shape = 'u32[144,128]{1,0:T(1,128)}', space=vmem, size = 0x12000, scoped, tag = 'internal scratch']
  %s0 = inlined_call_operand.hbm [shape: f32[8,64], index: 0, kind: input, shape index: {}]
  %s1 = inlined_call_operand.hbm [shape: f32[8,64], index: 1, kind: input, shape index: {}]
  %s2 = inlined_call_operand.hbm [shape: f32[8,64], index: 2, kind: output, shape index: {}]
  %s3 = sld [smem:[#allocation0]]
  $region26: #{tpu_custom_call.1} parent=0
    _
  %s5 = ssub.s32 1, %s3
  %s6 = scalar_select 0, %s5, %s3
  $region1: #{tpu_custom_call.1} parent=0
    #allocation2 [shape = 'u8[4096]{0}', space=vmem, size = 0x1000, scoped, tag = 'input window, operand 0, single buffered']
    #allocation3 [shape = 's32[1]{0}', space=sflag, size = 0x4, scoped, tag = 'scoped memory for tpu_custom_call.1']
    #allocation4 [shape = 's32[1]{0}', space=sflag, size = 0x4, scoped, tag = 'scoped memory for tpu_custom_call.1']
    #allocation5 [shape = 'u8[4096]{0}', space=vmem, size = 0x1000, scoped, tag = 'input window, operand 1, single buffered']
    #allocation6 [shape = 's32[1]{0}', space=sflag, size = 0x4, scoped, tag = 'scoped memory for tpu_custom_call.1']
    #allocation7 [shape = 'u8[4096]{0}', space=vmem, size = 0x1000, scoped, tag = 'output window, operand 0, single buffered']
    %7 = vsyncpa [#allocation3], 0
    %8 = vsyncpa [#allocation6], 0
    %9 = vsyncpa [#allocation4], 0
    // Predicated region
    $region2: #{tpu_custom_call.1} parent=1 // pred_check
      _
    $region3: #{tpu_custom_call.1} parent=1 // pred_check_branch
      %11 = sbr.rel (0) target = $region5
    $region4: #{tpu_custom_call.1} parent=1 // pred_region
      %s13 = ssub.s32 128, 128
      %14 = vsyncadd [#allocation3], %s13
      %s16 = sshll.u32 [#allocation2], 4
      %s17 = int_to_ptr.vmem [resolvable:$true] %s16
      %19 = dma.hbm_to_vmem [thread:$0]  %s0, 128, %s17, [#allocation3]
    $region5: #{tpu_custom_call.1} parent=1 // pred_fallthru
      _
    // Predicated region
    $region6: #{tpu_custom_call.1} parent=1 // pred_check
      _
    $region7: #{tpu_custom_call.1} parent=1 // pred_check_branch
      %21 = sbr.rel (0) target = $region9
    $region8: #{tpu_custom_call.1} parent=1 // pred_region
      %s23 = ssub.s32 128, 128
      %24 = vsyncadd [#allocation6], %s23
      %s26 = sshll.u32 [#allocation5], 4
      %s27 = int_to_ptr.vmem [resolvable:$true] %s26
      %29 = dma.hbm_to_vmem [thread:$0]  %s1, 128, %s27, [#allocation6]
    $region9: #{tpu_custom_call.1} parent=1 // pred_fallthru
      _
    // Predicated region
    $region10: #{tpu_custom_call.1} parent=1 // pred_check
      _
    $region11: #{tpu_custom_call.1} parent=1 // pred_check_branch
      %31 = sbr.rel (0) target = $region13
    $region12: #{tpu_custom_call.1} parent=1 // pred_region
      %32 = dma.done [#allocation3], 128
    $region13: #{tpu_custom_call.1} parent=1 // pred_fallthru
      _
    // Predicated region
    $region14: #{tpu_custom_call.1} parent=1 // pred_check
      _
    $region15: #{tpu_custom_call.1} parent=1 // pred_check_branch
      %34 = sbr.rel (0) target = $region17
    $region16: #{tpu_custom_call.1} parent=1 // pred_region
      %35 = dma.done [#allocation6], 128
    $region17: #{tpu_custom_call.1} parent=1 // pred_fallthru
      _
    %v36 = vld [vmem:[#allocation2] sm:$0xff]
    %v37 = vld [vmem:[#allocation5] sm:$0xff]
    %v38 = vadd.f32 %v36, %v37
    %vm39 = vcmask 523264
    %40 = vst.msk [vmem:[#allocation7] sm:$0xff] %vm39, %v38
    // Predicated region
    $region18: #{tpu_custom_call.1} parent=1 // pred_check
      _
    $region19: #{tpu_custom_call.1} parent=1 // pred_check_branch
      %42 = sbr.rel (0) target = $region21
    $region20: #{tpu_custom_call.1} parent=1 // pred_region
      %s44 = ssub.s32 128, 128
      %45 = vsyncadd [#allocation4], %s44
      %s47 = sshll.u32 [#allocation7], 4
      %s48 = int_to_ptr.vmem [resolvable:$true] %s47
      %50 = dma.vmem_to_hbm [thread:$0]  %s48, 128, %s2, [#allocation4]
    $region21: #{tpu_custom_call.1} parent=1 // pred_fallthru
      _
    // Predicated region
    $region22: #{tpu_custom_call.1} parent=1 // pred_check
      _
    $region23: #{tpu_custom_call.1} parent=1 // pred_check_branch
      %52 = sbr.rel (0) target = $region25
    $region24: #{tpu_custom_call.1} parent=1 // pred_region
      %53 = dma.done [#allocation4], 128
    $region25: #{tpu_custom_call.1} parent=1 // pred_fallthru
      _
    %54 = vsyncpa [#allocation3], 1
    %55 = vsyncpa [#allocation6], 1
    %56 = vsyncpa [#allocation4], 1

</llo_original>
